<compile_context>
chip_gen: v7x
topology: tpu7x:2x2x1
jax: 0.10.0
libtpu: 0.0.40
codegen_flags: <defaults>
</compile_context>

<pallas_src>
import jax
import jax.numpy as jnp
from jax.experimental import pallas as pl
from jax.experimental.pallas import tpu as pltpu

LATENT_DIM = 50
H1 = 100
H2 = 1000

# Padded, MXU/lane-friendly sizes.
DP = 128      # latent 50    -> 128
H1P = 128     # hidden1 100  -> 128
H2P = 1024    # hidden2 1000 -> 1024


def _round_up(a, m):
    return (a + m - 1) // m * m


def _leaky_relu(x, negative_slope=0.01):
    # matches torch.nn.functional.leaky_relu default slope
    return jnp.where(x >= 0, x, negative_slope * x)


def _softplus(x):
    # numerically stable softplus, matches torch.nn.functional.softplus
    return jnp.maximum(x, 0.0) + jnp.log1p(jnp.exp(-jnp.abs(x)))


def _pad2(a, rows, cols, dtype):
    a = a.astype(jnp.float32)
    a = jnp.pad(a, ((0, rows - a.shape[0]), (0, cols - a.shape[1])))
    return a.astype(dtype)


def prepare_params(w1, b1, w2, b2, w3, b3):
    """Pad + cast the weights ONCE (hoisted out of the per-call path).

    Weights stored (in, out), biases (1, out).  Zero padding is exact for this
    network: leaky_relu(0)=0 and padded weight rows/cols are zero, so padded
    lanes contribute nothing to the real outputs.
    """
    n_inputs = w3.shape[1]
    n_pad = _round_up(n_inputs, 128)
    return dict(
        n_inputs=n_inputs,
        w1=_pad2(w1, DP, H1P, jnp.bfloat16),
        b1=_pad2(b1, 1, H1P, jnp.float32),
        w2=_pad2(w2, H1P, H2P, jnp.bfloat16),
        b2=_pad2(b2, 1, H2P, jnp.float32),
        w3=_pad2(w3, H2P, n_pad, jnp.bfloat16),
        b3=_pad2(b3, 1, n_pad, jnp.float32),
    )


def decoder_kernel(x_ref, w1_ref, b1_ref, w2_ref, b2_ref, w3_ref, b3_ref,
                   out_ref):
    # Layers 1-2 recomputed per step: cheap, and removes any cross-step carry
    # so both grid axes can be marked "parallel" and W3 can stay resident
    # across batch tiles.
    h1 = jnp.dot(x_ref[...], w1_ref[...], preferred_element_type=jnp.float32)
    h1 = _leaky_relu(h1 + b1_ref[...]).astype(jnp.bfloat16)
    h2 = jnp.dot(h1, w2_ref[...], preferred_element_type=jnp.float32)
    h2 = _leaky_relu(h2 + b2_ref[...]).astype(jnp.bfloat16)
    h3 = jnp.dot(h2, w3_ref[...], preferred_element_type=jnp.float32)
    out_ref[...] = _softplus(h3 + b3_ref[...]).astype(out_ref.dtype)


def decoder_forward(x, prepared, out_dtype=jnp.float32):
    """x: (B, latent_dim) f32. Returns (B, n_inputs) in out_dtype."""
    n_inputs = prepared["n_inputs"]
    w1, b1, w2, b2, w3, b3 = (prepared[k]
                              for k in ("w1", "b1", "w2", "b2", "w3", "b3"))
    N_pad = w3.shape[1]
    B = x.shape[0]

    # ---- tile sizes --------------------------------------------------------
    B16 = _round_up(B, 16)              # bf16 packs 2 rows/sublane
    TB = min(512, B16)                  # batch tile
    B_pad = _round_up(B, TB)
    nb = B_pad // TB

    # Largest lane-dense column tile that divides the padded output width.
    TN = next(t for t in (1024, 512, 256, 128) if N_pad % t == 0)
    nj = N_pad // TN

    # Only the (tiny) activation gets padded per call; weights were prepared.
    xp = _pad2(x, B_pad, DP, jnp.bfloat16)

    # ---- truthful cost estimate --------------------------------------------
    flops = (2 * B_pad * H2P * N_pad                       # layer 3
             + nj * 2 * B_pad * (DP * H1P + H1P * H2P))    # layers 1-2, per j
    bytes_accessed = (
        nj * xp.size * 2                                   # x re-read per column tile
        + (w1.size + w2.size + w3.size) * 2                # bf16 weights, read once
        + (b1.size + b2.size + b3.size) * 4                # f32 biases
        + B_pad * N_pad * jnp.dtype(out_dtype).itemsize)   # output writeback

    out = pl.pallas_call(
        decoder_kernel,
        out_shape=jax.ShapeDtypeStruct((B_pad, N_pad), out_dtype),
        grid_spec=pltpu.PrefetchScalarGridSpec(
            num_scalar_prefetch=0,
            # Column tiles on the OUTER axis: W3/b3 block index only depends
            # on j, so each W3 column tile is fetched from HBM exactly once.
            grid=(nj, nb),
            in_specs=[
                pl.BlockSpec((TB, DP),   lambda j, i: (i, 0)),   # x tile
                pl.BlockSpec((DP, H1P),  lambda j, i: (0, 0)),   # W1 (resident)
                pl.BlockSpec((1, H1P),   lambda j, i: (0, 0)),   # b1 (resident)
                pl.BlockSpec((H1P, H2P), lambda j, i: (0, 0)),   # W2 (resident)
                pl.BlockSpec((1, H2P),   lambda j, i: (0, 0)),   # b2 (resident)
                pl.BlockSpec((H2P, TN),  lambda j, i: (0, j)),   # W3 column tile
                pl.BlockSpec((1, TN),    lambda j, i: (0, j)),   # b3 column tile
            ],
            out_specs=pl.BlockSpec((TB, TN), lambda j, i: (i, j)),
        ),
        compiler_params=pltpu.CompilerParams(
            # No cross-step carry anywhere -> both axes safely parallel
            # (v7x megacore gets work even when nb == 1).
            dimension_semantics=("parallel", "parallel"),
            vmem_limit_bytes=32 << 20),
        cost_estimate=pl.CostEstimate(
            flops=flops,
            transcendentals=2 * B_pad * N_pad,
            bytes_accessed=bytes_accessed),
    )(xp, w1, b1, w2, b2, w3, b3)

    # Padded rows/columns (softplus(0)=ln 2 in padded lanes) are sliced away.
    return out[:B, :n_inputs]


def init_params(key, latent_dim, n_inputs):
    """Deterministic init mimicking nn.Linear default (uniform(-1/sqrt(in), 1/sqrt(in)))."""
    dims = [(latent_dim, H1), (H1, H2), (H2, n_inputs)]
    params = []
    for fan_in, fan_out in dims:
        key, kw, kb = jax.random.split(key, 3)
        bound = 1.0 / jnp.sqrt(fan_in)
        # stored as (in, out): transpose of PyTorch's (out, in) weight
        w = jax.random.uniform(kw, (fan_in, fan_out), jnp.float32, -bound, bound)
        b = jax.random.uniform(kb, (1, fan_out), jnp.float32, -bound, bound)
        params += [w, b]
    return params


def reference_forward(x, w1, b1, w2, b2, w3, b3):
    # Same math as the kernel (bf16 operands, f32 accumulation) via plain XLA.
    bf16 = jnp.bfloat16
    h1 = _leaky_relu(
        jnp.dot(x.astype(bf16), w1.astype(bf16),
                preferred_element_type=jnp.float32) + b1)
    h2 = _leaky_relu(
        jnp.dot(h1.astype(bf16), w2.astype(bf16),
                preferred_element_type=jnp.float32) + b2)
    h3 = jnp.dot(h2.astype(bf16), w3.astype(bf16),
                 preferred_element_type=jnp.float32) + b3
    return _softplus(h3)


if __name__ == "__main__":
    key = jax.random.PRNGKey(0)
    batch = 2
    n_inputs = 64

    key, kx = jax.random.split(key)
    x = jax.random.normal(kx, (batch, LATENT_DIM), dtype=jnp.float32)
    params = init_params(key, LATENT_DIM, n_inputs)

    prepared = prepare_params(*params)          # one-time weight pad/cast
    out = decoder_forward(x, prepared)          # f32 output (default)
    out = jax.block_until_ready(out)

    ref = reference_forward(x, *params)
    assert out.shape == (batch, n_inputs)
    assert jnp.allclose(out, ref, atol=1e-3, rtol=1e-3), (
        float(jnp.max(jnp.abs(out - ref))))

    print("KERNEL_OK")
</pallas_src>

<mosaic_0001>
module attributes {stable_mosaic.version = 11 : i64} {
  func.func @decoder_kernel(%arg0: i32, %arg1: i32, %arg2: memref<16x128xbf16, #tpu.memory_space<vmem>>, %arg3: memref<128x128xbf16, #tpu.memory_space<vmem>>, %arg4: memref<1x128xf32, #tpu.memory_space<vmem>>, %arg5: memref<128x1024xbf16, #tpu.memory_space<vmem>>, %arg6: memref<1x1024xf32, #tpu.memory_space<vmem>>, %arg7: memref<1024x128xbf16, #tpu.memory_space<vmem>>, %arg8: memref<1x128xf32, #tpu.memory_space<vmem>>, %arg9: memref<16x128xf32, #tpu.memory_space<vmem>>) attributes {dimension_semantics = [#tpu.dimension_semantics<parallel>, #tpu.dimension_semantics<parallel>], iteration_bounds = array<i64: 1, 1>, scalar_prefetch = 0 : i64, scratch_operands = 0 : i64, tpu.core_type = #tpu.core_type<tc>, window_params = [{transform_indices = @transform_0, window_bounds = array<i64: 16, 128>}, {pipeline_mode = #tpu.pipeline_mode<synchronous>, transform_indices = @transform_1, window_bounds = array<i64: 128, 128>}, {pipeline_mode = #tpu.pipeline_mode<synchronous>, transform_indices = @transform_2, window_bounds = array<i64: 1, 128>}, {pipeline_mode = #tpu.pipeline_mode<synchronous>, transform_indices = @transform_3, window_bounds = array<i64: 128, 1024>}, {pipeline_mode = #tpu.pipeline_mode<synchronous>, transform_indices = @transform_4, window_bounds = array<i64: 1, 1024>}, {transform_indices = @transform_5, window_bounds = array<i64: 1024, 128>}, {transform_indices = @transform_6, window_bounds = array<i64: 1, 128>}, {transform_indices = @transform_7, window_bounds = array<i64: 16, 128>}]} {
    %c0 = arith.constant 0 : index
    %c0_0 = arith.constant 0 : index
    %0 = vector.load %arg2[%c0, %c0_0] : memref<16x128xbf16, #tpu.memory_space<vmem>>, vector<16x128xbf16>
    %c0_1 = arith.constant 0 : index
    %c0_2 = arith.constant 0 : index
    %1 = vector.load %arg3[%c0_1, %c0_2] : memref<128x128xbf16, #tpu.memory_space<vmem>>, vector<128x128xbf16>
    %cst = arith.constant dense<0.000000e+00> : vector<16x128xf32>
    %2 = tpu.matmul %0, %1, %cst {dimension_numbers = #tpu.dot_dimension_numbers<[1], [0], [0], [1], [0, 0, 1, 1], [], []>} : vector<16x128xbf16>, vector<128x128xbf16>, vector<16x128xf32> -> vector<16x128xf32>
    %c0_3 = arith.constant 0 : index
    %c0_4 = arith.constant 0 : index
    %3 = vector.load %arg4[%c0_3, %c0_4] : memref<1x128xf32, #tpu.memory_space<vmem>>, vector<1x128xf32>
    %4 = vector.broadcast %3 : vector<1x128xf32> to vector<16x128xf32>
    %5 = arith.addf %2, %4 : vector<16x128xf32>
    %cst_5 = arith.constant 0.000000e+00 : f32
    %6 = vector.broadcast %cst_5 : f32 to vector<16x128xf32>
    %7 = arith.cmpf oge, %5, %6 : vector<16x128xf32>
    %cst_6 = arith.constant 0.00999999977 : f32
    %8 = vector.broadcast %cst_6 : f32 to vector<16x128xf32>
    %9 = arith.mulf %8, %5 : vector<16x128xf32>
    %10 = arith.select %7, %5, %9 : vector<16x128xi1>, vector<16x128xf32>
    %11 = arith.truncf %10 : vector<16x128xf32> to vector<16x128xbf16>
    %c0_7 = arith.constant 0 : index
    %c0_8 = arith.constant 0 : index
    %12 = vector.load %arg5[%c0_7, %c0_8] : memref<128x1024xbf16, #tpu.memory_space<vmem>>, vector<128x1024xbf16>
    %cst_9 = arith.constant dense<0.000000e+00> : vector<16x1024xf32>
    %13 = tpu.matmul %11, %12, %cst_9 {dimension_numbers = #tpu.dot_dimension_numbers<[1], [0], [0], [1], [0, 0, 1, 1], [], []>} : vector<16x128xbf16>, vector<128x1024xbf16>, vector<16x1024xf32> -> vector<16x1024xf32>
    %c0_10 = arith.constant 0 : index
    %c0_11 = arith.constant 0 : index
    %14 = vector.load %arg6[%c0_10, %c0_11] : memref<1x1024xf32, #tpu.memory_space<vmem>>, vector<1x1024xf32>
    %15 = vector.broadcast %14 : vector<1x1024xf32> to vector<16x1024xf32>
    %16 = arith.addf %13, %15 : vector<16x1024xf32>
    %cst_12 = arith.constant 0.000000e+00 : f32
    %17 = vector.broadcast %cst_12 : f32 to vector<16x1024xf32>
    %18 = arith.cmpf oge, %16, %17 : vector<16x1024xf32>
    %cst_13 = arith.constant 0.00999999977 : f32
    %19 = vector.broadcast %cst_13 : f32 to vector<16x1024xf32>
    %20 = arith.mulf %19, %16 : vector<16x1024xf32>
    %21 = arith.select %18, %16, %20 : vector<16x1024xi1>, vector<16x1024xf32>
    %22 = arith.truncf %21 : vector<16x1024xf32> to vector<16x1024xbf16>
    %c0_14 = arith.constant 0 : index
    %c0_15 = arith.constant 0 : index
    %23 = vector.load %arg7[%c0_14, %c0_15] : memref<1024x128xbf16, #tpu.memory_space<vmem>>, vector<1024x128xbf16>
    %cst_16 = arith.constant dense<0.000000e+00> : vector<16x128xf32>
    %24 = tpu.matmul %22, %23, %cst_16 {dimension_numbers = #tpu.dot_dimension_numbers<[1], [0], [0], [1], [0, 0, 1, 1], [], []>} : vector<16x1024xbf16>, vector<1024x128xbf16>, vector<16x128xf32> -> vector<16x128xf32>
    %c0_17 = arith.constant 0 : index
    %c0_18 = arith.constant 0 : index
    %25 = vector.load %arg8[%c0_17, %c0_18] : memref<1x128xf32, #tpu.memory_space<vmem>>, vector<1x128xf32>
    %26 = vector.broadcast %25 : vector<1x128xf32> to vector<16x128xf32>
    %27 = arith.addf %24, %26 : vector<16x128xf32>
    %cst_19 = arith.constant 0.000000e+00 : f32
    %28 = vector.broadcast %cst_19 : f32 to vector<16x128xf32>
    %29 = arith.maximumf %27, %28 : vector<16x128xf32>
    %30 = math.absf %27 : vector<16x128xf32>
    %cst_20 = arith.constant 0.000000e+00 : f32
    %31 = vector.broadcast %cst_20 : f32 to vector<16x128xf32>
    %32 = arith.subf %31, %30 : vector<16x128xf32>
    %33 = math.exp %32 : vector<16x128xf32>
    %34 = math.log1p %33 : vector<16x128xf32>
    %35 = arith.addf %29, %34 : vector<16x128xf32>
    %c0_21 = arith.constant 0 : index
    %c0_22 = arith.constant 0 : index
    %36 = vector.load %arg9[%c0_21, %c0_22] : memref<16x128xf32, #tpu.memory_space<vmem>>, vector<16x128xf32>
    tpu.vector_store %arg9[%c0_21, %c0_22], %35 {strides = array<i32>} : memref<16x128xf32, #tpu.memory_space<vmem>>, vector<16x128xf32>,
    return
  }
  func.func @transform_0(%arg0: i32, %arg1: i32) -> (i32, i32) {
    %c0_i32 = arith.constant 0 : i32
    %c0_i32_0 = arith.constant 0 : i32
    return %arg1, %c0_i32 : i32, i32
  }
  func.func @transform_1(%arg0: i32, %arg1: i32) -> (i32, i32) {
    %c0_i32 = arith.constant 0 : i32
    %c0_i32_0 = arith.constant 0 : i32
    %c0_i32_1 = arith.constant 0 : i32
    return %c0_i32, %c0_i32_0 : i32, i32
  }
  func.func @transform_2(%arg0: i32, %arg1: i32) -> (i32, i32) {
    %c0_i32 = arith.constant 0 : i32
    %c0_i32_0 = arith.constant 0 : i32
    %c0_i32_1 = arith.constant 0 : i32
    return %c0_i32, %c0_i32_0 : i32, i32
  }
  func.func @transform_3(%arg0: i32, %arg1: i32) -> (i32, i32) {
    %c0_i32 = arith.constant 0 : i32
    %c0_i32_0 = arith.constant 0 : i32
    %c0_i32_1 = arith.constant 0 : i32
    return %c0_i32, %c0_i32_0 : i32, i32
  }
  func.func @transform_4(%arg0: i32, %arg1: i32) -> (i32, i32) {
    %c0_i32 = arith.constant 0 : i32
    %c0_i32_0 = arith.constant 0 : i32
    %c0_i32_1 = arith.constant 0 : i32
    return %c0_i32, %c0_i32_0 : i32, i32
  }
  func.func @transform_5(%arg0: i32, %arg1: i32) -> (i32, i32) {
    %c0_i32 = arith.constant 0 : i32
    %c0_i32_0 = arith.constant 0 : i32
    return %c0_i32, %arg0 : i32, i32
  }
  func.func @transform_6(%arg0: i32, %arg1: i32) -> (i32, i32) {
    %c0_i32 = arith.constant 0 : i32
    %c0_i32_0 = arith.constant 0 : i32
    return %c0_i32, %arg0 : i32, i32
  }
  func.func @transform_7(%arg0: i32, %arg1: i32) -> (i32, i32) {
    %c0_i32 = arith.constant 0 : i32
    return %arg1, %arg0 : i32, i32
  }
}

</mosaic_0001>

<llo_original>
// kernel: tpu_custom_call.1
$region0: #{tpu_custom_call.1}
  #allocation0 [shape = 'u32[]', space=smem, size = 0x4, offset = 0x4, fixed_abs, tag = 'smem constant byte address 0x4 - core index']
  #allocation1 [shape = 'u32[144,128]{1,0:T(1,128)}', space=vmem, size = 0x12000, scoped, tag = 'internal scratch']
  %s0 = inlined_call_operand.hbm [shape: bf16[16,128], index: 0, kind: input, shape index: {}]
  %s1 = inlined_call_operand.hbm [shape: bf16[128,128], index: 1, kind: input, shape index: {}]
  %s2 = inlined_call_operand.vmem [shape: f32[1,128], index: 2, kind: input, shape index: {}]
  %s3 = inlined_call_operand.hbm [shape: bf16[128,1024], index: 3, kind: input, shape index: {}]
  %s4 = inlined_call_operand.vmem [shape: f32[1,1024], index: 4, kind: input, shape index: {}]
  %s5 = inlined_call_operand.hbm [shape: bf16[1024,128], index: 5, kind: input, shape index: {}]
  %s6 = inlined_call_operand.vmem [shape: f32[1,128], index: 6, kind: input, shape index: {}]
  %s7 = inlined_call_operand.hbm [shape: f32[16,128], index: 7, kind: output, shape index: {}]
  %s8 = sld [smem:[#allocation0]]
  $region54: #{tpu_custom_call.1} parent=0
    _
  %s10 = ssub.s32 1, %s8
  %s11 = scalar_select 0, %s10, %s8
  $region1: #{tpu_custom_call.1} parent=0
    #allocation2 [shape = 'u8[4096]{0}', space=vmem, size = 0x1000, scoped, tag = 'input window, operand 0, single buffered']
    #allocation3 [shape = 's32[1]{0}', space=sflag, size = 0x4, scoped, tag = 'scoped memory for tpu_custom_call.1']
    #allocation4 [shape = 's32[1]{0}', space=sflag, size = 0x4, scoped, tag = 'scoped memory for tpu_custom_call.1']
    #allocation5 [shape = 'u8[32768]{0}', space=vmem, size = 0x8000, scoped, tag = 'input window, operand 1, single buffered']
    #allocation6 [shape = 's32[1]{0}', space=sflag, size = 0x4, scoped, tag = 'scoped memory for tpu_custom_call.1']
    #allocation7 [shape = 'u8[262144]{0}', space=vmem, size = 0x40000, scoped, tag = 'input window, operand 3, single buffered']
    #allocation8 [shape = 'u8[262144]{0}', space=vmem, size = 0x40000, scoped, tag = 'input window, operand 5, single buffered']
    #allocation9 [shape = 's32[1]{0}', space=sflag, size = 0x4, scoped, tag = 'scoped memory for tpu_custom_call.1']
    #allocation10 [shape = 'u8[8192]{0}', space=vmem, size = 0x2000, scoped, tag = 'output window, operand 0, single buffered']
    %12 = vsyncpa [#allocation3], 0
    %13 = vsyncpa [#allocation6], 0
    %14 = vsyncpa [#allocation9], 0
    %15 = vsyncpa [#allocation4], 0
    // Predicated region
    $region2: #{tpu_custom_call.1} parent=1 // pred_check
      _
    $region3: #{tpu_custom_call.1} parent=1 // pred_check_branch
      %17 = sbr.rel (0) target = $region5
    $region4: #{tpu_custom_call.1} parent=1 // pred_region
      %s19 = ssub.s32 128, 128
      %20 = vsyncadd [#allocation3], %s19
      %s21 = sshll.u32 [#allocation2], 4
      %s22 = int_to_ptr.vmem [resolvable:$true] %s21
      %27 = dma.hbm_to_vmem [thread:$0]  %s0, 128, %s22, [#allocation3], 64, 64, 4
    $region5: #{tpu_custom_call.1} parent=1 // pred_fallthru
      _
    // Predicated region
    $region6: #{tpu_custom_call.1} parent=1 // pred_check
      _
    $region7: #{tpu_custom_call.1} parent=1 // pred_check_branch
      %29 = sbr.rel (0) target = $region9
    $region8: #{tpu_custom_call.1} parent=1 // pred_region
      %s31 = ssub.s32 1024, 1024
      %32 = vsyncadd [#allocation6], %s31
      %s33 = sshll.u32 [#allocation5], 4
      %s34 = int_to_ptr.vmem [resolvable:$true] %s33
      %39 = dma.hbm_to_vmem [thread:$0]  %s1, 1024, %s34, [#allocation6], 64, 64, 4
    $region9: #{tpu_custom_call.1} parent=1 // pred_fallthru
      _
    // Predicated region
    $region10: #{tpu_custom_call.1} parent=1 // pred_check
      _
    $region11: #{tpu_custom_call.1} parent=1 // pred_check_branch
      %41 = sbr.rel (0) target = $region13
    $region12: #{tpu_custom_call.1} parent=1 // pred_region
      _
    $region13: #{tpu_custom_call.1} parent=1 // pred_fallthru
      _
    // Predicated region
    $region14: #{tpu_custom_call.1} parent=1 // pred_check
      _
    $region15: #{tpu_custom_call.1} parent=1 // pred_check_branch
      %43 = sbr.rel (0) target = $region17
    $region16: #{tpu_custom_call.1} parent=1 // pred_region
      %s45 = ssub.s32 8192, 8192
      %46 = vsyncadd [#allocation6], %s45
      %s47 = sshll.u32 [#allocation7], 4
      %s48 = int_to_ptr.vmem [resolvable:$true] %s47
      %53 = dma.hbm_to_vmem [thread:$0]  %s3, 8192, %s48, [#allocation6], 512, 512, 32
    $region17: #{tpu_custom_call.1} parent=1 // pred_fallthru
      _
    // Predicated region
    $region18: #{tpu_custom_call.1} parent=1 // pred_check
      _
    $region19: #{tpu_custom_call.1} parent=1 // pred_check_branch
      %55 = sbr.rel (0) target = $region21
    $region20: #{tpu_custom_call.1} parent=1 // pred_region
      _
    $region21: #{tpu_custom_call.1} parent=1 // pred_fallthru
      _
    // Predicated region
    $region22: #{tpu_custom_call.1} parent=1 // pred_check
      _
    $region23: #{tpu_custom_call.1} parent=1 // pred_check_branch
      %57 = sbr.rel (0) target = $region25
    $region24: #{tpu_custom_call.1} parent=1 // pred_region
      %s59 = ssub.s32 8192, 8192
      %60 = vsyncadd [#allocation9], %s59
      %s61 = sshll.u32 [#allocation8], 4
      %s62 = int_to_ptr.vmem [resolvable:$true] %s61
      %67 = dma.hbm_to_vmem [thread:$0]  %s5, 8192, %s62, [#allocation9], 64, 64, 4
    $region25: #{tpu_custom_call.1} parent=1 // pred_fallthru
      _
    // Predicated region
    $region26: #{tpu_custom_call.1} parent=1 // pred_check
      _
    $region27: #{tpu_custom_call.1} parent=1 // pred_check_branch
      %69 = sbr.rel (0) target = $region29
    $region28: #{tpu_custom_call.1} parent=1 // pred_region
      _
    $region29: #{tpu_custom_call.1} parent=1 // pred_fallthru
      _
    // Predicated region
    $region30: #{tpu_custom_call.1} parent=1 // pred_check
      _
    $region31: #{tpu_custom_call.1} parent=1 // pred_check_branch
      %71 = sbr.rel (0) target = $region33
    $region32: #{tpu_custom_call.1} parent=1 // pred_region
      %72 = dma.done [#allocation3], 128
    $region33: #{tpu_custom_call.1} parent=1 // pred_fallthru
      _
    // Predicated region
    $region34: #{tpu_custom_call.1} parent=1 // pred_check
      _
    $region35: #{tpu_custom_call.1} parent=1 // pred_check_branch
      %74 = sbr.rel (0) target = $region37
    $region36: #{tpu_custom_call.1} parent=1 // pred_region
      %75 = dma.done [#allocation6], 1024
    $region37: #{tpu_custom_call.1} parent=1 // pred_fallthru
      _
    // Predicated region
    $region38: #{tpu_custom_call.1} parent=1 // pred_check
      _
    $region39: #{tpu_custom_call.1} parent=1 // pred_check_branch
      %77 = sbr.rel (0) target = $region41
    $region40: #{tpu_custom_call.1} parent=1 // pred_region
      %78 = dma.done [#allocation6], 8192
    $region41: #{tpu_custom_call.1} parent=1 // pred_fallthru
      _
    // Predicated region
    $region42: #{tpu_custom_call.1} parent=1 // pred_check
      _
    $region43: #{tpu_custom_call.1} parent=1 // pred_check_branch
      %80 = sbr.rel (0) target = $region45
    $region44: #{tpu_custom_call.1} parent=1 // pred_region
      %81 = dma.done [#allocation9], 8192
    $region45: #{tpu_custom_call.1} parent=1 // pred_fallthru
      _
    %v83 = vld [vmem:[#allocation2] sm:$0xf]
    %v84 = vld [vmem:[#allocation2 + $0x4] sm:$0xf]
    %v85 = vld [vmem:[#allocation5] sm:$0xf]
    %v86 = vld [vmem:[#allocation5 + $0x4] sm:$0xf]
    %v87 = vld [vmem:[#allocation5 + $0x8] sm:$0xf]
    %v88 = vld [vmem:[#allocation5 + $0xc] sm:$0xf]
    %v89 = vld [vmem:[#allocation5 + $0x10] sm:$0xf]
    %v90 = vld [vmem:[#allocation5 + $0x14] sm:$0xf]
    %v91 = vld [vmem:[#allocation5 + $0x18] sm:$0xf]
    %v92 = vld [vmem:[#allocation5 + $0x1c] sm:$0xf]
    %v93 = vld [vmem:[#allocation5 + $0x20] sm:$0xf]
    %v94 = vld [vmem:[#allocation5 + $0x24] sm:$0xf]
    %v95 = vld [vmem:[#allocation5 + $0x28] sm:$0xf]
    %v96 = vld [vmem:[#allocation5 + $0x2c] sm:$0xf]
    %v97 = vld [vmem:[#allocation5 + $0x30] sm:$0xf]
    %v98 = vld [vmem:[#allocation5 + $0x34] sm:$0xf]
    %v99 = vld [vmem:[#allocation5 + $0x38] sm:$0xf]
    %v100 = vld [vmem:[#allocation5 + $0x3c] sm:$0xf]
    %v101 = vld [vmem:[%s2] sm:$0x1]
    %v103 = vlaneseq
    %v104 = vshrl.u32 %v103, 7
    %v105 = vsub.s32 0, %v104
    %v106 = vrot.slane %v101, %v105
    %v110 = vunpack.c.l.b16 %v83
    %v111 = vunpack.c.l.b16 %v84
    %v112 = vpack.c.b16 %v111, %v110
    %v130 = vunpack.c.l.b16 %v85
    %v131 = vunpack.c.l.b16 %v86
    %v132 = vunpack.c.l.b16 %v87
    %v133 = vunpack.c.l.b16 %v88
    %v134 = vunpack.c.l.b16 %v89
    %v135 = vunpack.c.l.b16 %v90
    %v136 = vunpack.c.l.b16 %v91
    %v137 = vunpack.c.l.b16 %v92
    %v138 = vunpack.c.l.b16 %v93
    %v139 = vunpack.c.l.b16 %v94
    %v140 = vunpack.c.l.b16 %v95
    %v141 = vunpack.c.l.b16 %v96
    %v142 = vunpack.c.l.b16 %v97
    %v143 = vunpack.c.l.b16 %v98
    %v144 = vunpack.c.l.b16 %v99
    %v145 = vunpack.c.l.b16 %v100
    %v146 = vpack.c.b16 %v131, %v130
    %v147 = vpack.c.b16 %v133, %v132
    %v148 = vpack.c.b16 %v135, %v134
    %v149 = vpack.c.b16 %v137, %v136
    %v150 = vpack.c.b16 %v139, %v138
    %v151 = vpack.c.b16 %v141, %v140
    %v152 = vpack.c.b16 %v143, %v142
    %v153 = vpack.c.b16 %v145, %v144
    %162 = vmatprep.subr.bf16.mxu0 0
    %163 = vmatpush1.bf16.msra.mxu0 %v146
    %164 = vmatprep.subr.bf16.mxu0 0
    %165 = vmatpush1.bf16.msra.mxu0 %v147
    %166 = vmatprep.subr.bf16.mxu0 0
    %167 = vmatpush1.bf16.msra.mxu0 %v148
    %168 = vmatprep.subr.bf16.mxu0 0
    %169 = vmatpush1.bf16.msra.mxu0 %v149
    %170 = vmatprep.subr.bf16.mxu0 0
    %171 = vmatpush1.bf16.msra.mxu0 %v150
    %172 = vmatprep.subr.bf16.mxu0 0
    %173 = vmatpush1.bf16.msra.mxu0 %v151
    %174 = vmatprep.subr.bf16.mxu0 0
    %175 = vmatpush1.bf16.msra.mxu0 %v152
    %176 = vmatprep.subr.bf16.mxu0 0
    %177 = vmatpush1.bf16.msra.mxu0 %v153
    %178 = vmatprep.subr.bf16.mxu0 0
    %179 = vmatpush1.bf16.msra.mxu0 0
    %180 = vmatprep.subr.bf16.mxu0 0
    %181 = vmatpush1.bf16.msra.mxu0 0
    %182 = vmatprep.subr.bf16.mxu0 0
    %183 = vmatpush1.bf16.msra.mxu0 0
    %184 = vmatprep.subr.bf16.mxu0 0
    %185 = vmatpush1.bf16.msra.mxu0 0
    %186 = vmatprep.subr.bf16.mxu0 0
    %187 = vmatpush1.bf16.msra.mxu0 0
    %188 = vmatprep.subr.bf16.mxu0 0
    %189 = vmatpush1.bf16.msra.mxu0 0
    %190 = vmatprep.subr.bf16.mxu0 0
    %191 = vmatpush1.bf16.msra.mxu0 0
    %192 = vmatprep.subr.bf16.mxu0 0
    %193 = vmatpush1.bf16.msra.mxu0 0
    %194 = vmatprep.mubr.bf16.mxu0 0
    %195 = vmatmul.mubr.bf16.gmra.mrb[0].mxu0 %v112
    %v196 = vpop.f32.mrb[0].mxu0
    %v197 = vadd.f32 %v106, %v196
    %v198 = vpop.f32.mrb[0].mxu0
    %v199 = vpop.f32.mrb[0].mxu0
    %v200 = vadd.f32 %v106, %v199
    %v201 = vpop.f32.mrb[0].mxu0
    %202 = vdwg.mxu0
    %vm203 = vcmp.ge.f32.partialorder %v197, 0.0
    %vm204 = vcmp.ge.f32.partialorder %v200, 0.0
    %v205 = vmul.f32 %v197, 0.01
    %v206 = vmul.f32 %v200, 0.01
    %v207 = vsel %vm203, %v197, %v205
    %v208 = vsel %vm204, %v200, %v206
    %v209 = vpack.c.bf16 %v208, %v207
    %v210 = vld [vmem:[#allocation7] sm:$0xff]
    %v211 = vld [vmem:[#allocation7 + $0x8] sm:$0xff]
    %v212 = vld [vmem:[#allocation7 + $0x10] sm:$0xff]
    %v213 = vld [vmem:[#allocation7 + $0x18] sm:$0xff]
    %v214 = vld [vmem:[#allocation7 + $0x20] sm:$0xff]
    %v215 = vld [vmem:[#allocation7 + $0x28] sm:$0xff]
    %v216 = vld [vmem:[#allocation7 + $0x30] sm:$0xff]
    %v217 = vld [vmem:[#allocation7 + $0x38] sm:$0xff]
    %v218 = vld [vmem:[#allocation7 + $0x40] sm:$0xff]
    %v219 = vld [vmem:[#allocation7 + $0x48] sm:$0xff]
    %v220 = vld [vmem:[#allocation7 + $0x50] sm:$0xff]
    %v221 = vld [vmem:[#allocation7 + $0x58] sm:$0xff]
    %v222 = vld [vmem:[#allocation7 + $0x60] sm:$0xff]
    %v223 = vld [vmem:[#allocation7 + $0x68] sm:$0xff]
    %v224 = vld [vmem:[#allocation7 + $0x70] sm:$0xff]
    %v225 = vld [vmem:[#allocation7 + $0x78] sm:$0xff]
    %v226 = vld [vmem:[#allocation7 + $0x80] sm:$0xff]
    %v227 = vld [vmem:[#allocation7 + $0x88] sm:$0xff]
    %v228 = vld [vmem:[#allocation7 + $0x90] sm:$0xff]
    %v229 = vld [vmem:[#allocation7 + $0x98] sm:$0xff]
    %v230 = vld [vmem:[#allocation7 + $0xa0] sm:$0xff]
    %v231 = vld [vmem:[#allocation7 + $0xa8] sm:$0xff]
    %v232 = vld [vmem:[#allocation7 + $0xb0] sm:$0xff]
    %v233 = vld [vmem:[#allocation7 + $0xb8] sm:$0xff]
    %v234 = vld [vmem:[#allocation7 + $0xc0] sm:$0xff]
    %v235 = vld [vmem:[#allocation7 + $0xc8] sm:$0xff]
    %v236 = vld [vmem:[#allocation7 + $0xd0] sm:$0xff]
    %v237 = vld [vmem:[#allocation7 + $0xd8] sm:$0xff]
    %v238 = vld [vmem:[#allocation7 + $0xe0] sm:$0xff]
    %v239 = vld [vmem:[#allocation7 + $0xe8] sm:$0xff]
    %v240 = vld [vmem:[#allocation7 + $0xf0] sm:$0xff]
    %v241 = vld [vmem:[#allocation7 + $0xf8] sm:$0xff]
    %v242 = vld [vmem:[#allocation7 + $0x100] sm:$0xff]
    %v243 = vld [vmem:[#allocation7 + $0x108] sm:$0xff]
    %v244 = vld [vmem:[#allocation7 + $0x110] sm:$0xff]
    %v245 = vld [vmem:[#allocation7 + $0x118] sm:$0xff]
    %v246 = vld [vmem:[#allocation7 + $0x120] sm:$0xff]
    %v247 = vld [vmem:[#allocation7 + $0x128] sm:$0xff]
    %v248 = vld [vmem:[#allocation7 + $0x130] sm:$0xff]
    %v249 = vld [vmem:[#allocation7 + $0x138] sm:$0xff]
    %v250 = vld [vmem:[#allocation7 + $0x140] sm:$0xff]
    %v251 = vld [vmem:[#allocation7 + $0x148] sm:$0xff]
    %v252 = vld [vmem:[#allocation7 + $0x150] sm:$0xff]
    %v253 = vld [vmem:[#allocation7 + $0x158] sm:$0xff]
    %v254 = vld [vmem:[#allocation7 + $0x160] sm:$0xff]
    %v255 = vld [vmem:[#allocation7 + $0x168] sm:$0xff]
    %v256 = vld [vmem:[#allocation7 + $0x170] sm:$0xff]
    %v257 = vld [vmem:[#allocation7 + $0x178] sm:$0xff]
    %v258 = vld [vmem:[#allocation7 + $0x180] sm:$0xff]
    %v259 = vld [vmem:[#allocation7 + $0x188] sm:$0xff]
    %v260 = vld [vmem:[#allocation7 + $0x190] sm:$0xff]
    %v261 = vld [vmem:[#allocation7 + $0x198] sm:$0xff]
    %v262 = vld [vmem:[#allocation7 + $0x1a0] sm:$0xff]
    %v263 = vld [vmem:[#allocation7 + $0x1a8] sm:$0xff]
    %v264 = vld [vmem:[#allocation7 + $0x1b0] sm:$0xff]
    %v265 = vld [vmem:[#allocation7 + $0x1b8] sm:$0xff]
    %v266 = vld [vmem:[#allocation7 + $0x1c0] sm:$0xff]
    %v267 = vld [vmem:[#allocation7 + $0x1c8] sm:$0xff]
    %v268 = vld [vmem:[#allocation7 + $0x1d0] sm:$0xff]
    %v269 = vld [vmem:[#allocation7 + $0x1d8] sm:$0xff]
    %v270 = vld [vmem:[#allocation7 + $0x1e0] sm:$0xff]
    %v271 = vld [vmem:[#allocation7 + $0x1e8] sm:$0xff]
    %v272 = vld [vmem:[#allocation7 + $0x1f0] sm:$0xff]
    %v273 = vld [vmem:[#allocation7 + $0x1f8] sm:$0xff]
    %v274 = vld [vmem:[%s4] sm:$0xff]
    %v276 = vlaneseq
    %v277 = vshrl.u32 %v276, 7
    %v278 = vsub.s32 0, %v277
    %v279 = vrot.slane %v274, %v278
    %v280 = vlaneseq
    %v281 = vshrl.u32 %v280, 7
    %v282 = vsub.s32 1, %v281
    %v283 = vrot.slane %v274, %v282
    %v284 = vlaneseq
    %v285 = vshrl.u32 %v284, 7
    %v286 = vsub.s32 2, %v285
    %v287 = vrot.slane %v274, %v286
    %v288 = vlaneseq
    %v289 = vshrl.u32 %v288, 7
    %v290 = vsub.s32 3, %v289
    %v291 = vrot.slane %v274, %v290
    %v292 = vlaneseq
    %v293 = vshrl.u32 %v292, 7
    %v294 = vsub.s32 4, %v293
    %v295 = vrot.slane %v274, %v294
    %v296 = vlaneseq
    %v297 = vshrl.u32 %v296, 7
    %v298 = vsub.s32 5, %v297
    %v299 = vrot.slane %v274, %v298
    %v300 = vlaneseq
    %v301 = vshrl.u32 %v300, 7
    %v302 = vsub.s32 6, %v301
    %v303 = vrot.slane %v274, %v302
    %v304 = vlaneseq
    %v305 = vshrl.u32 %v304, 7
    %v306 = vsub.s32 7, %v305
    %v307 = vrot.slane %v274, %v306
    %v380 = vunpack.c.l.b16 %v210
    %v381 = vunpack.c.h.b16 %v210
    %v382 = vunpack.c.l.b16 %v211
    %v383 = vunpack.c.h.b16 %v211
    %v384 = vunpack.c.l.b16 %v212
    %v385 = vunpack.c.h.b16 %v212
    %v386 = vunpack.c.l.b16 %v213
    %v387 = vunpack.c.h.b16 %v213
    %v388 = vunpack.c.l.b16 %v214
    %v389 = vunpack.c.h.b16 %v214
    %v390 = vunpack.c.l.b16 %v215
    %v391 = vunpack.c.h.b16 %v215
    %v392 = vunpack.c.l.b16 %v216
    %v393 = vunpack.c.h.b16 %v216
    %v394 = vunpack.c.l.b16 %v217
    %v395 = vunpack.c.h.b16 %v217
    %v396 = vunpack.c.l.b16 %v218
    %v397 = vunpack.c.h.b16 %v218
    %v398 = vunpack.c.l.b16 %v219
    %v399 = vunpack.c.h.b16 %v219
    %v400 = vunpack.c.l.b16 %v220
    %v401 = vunpack.c.h.b16 %v220
    %v402 = vunpack.c.l.b16 %v221
    %v403 = vunpack.c.h.b16 %v221
    %v404 = vunpack.c.l.b16 %v222
    %v405 = vunpack.c.h.b16 %v222
    %v406 = vunpack.c.l.b16 %v223
    %v407 = vunpack.c.h.b16 %v223
    %v408 = vunpack.c.l.b16 %v224
    %v409 = vunpack.c.h.b16 %v224
    %v410 = vunpack.c.l.b16 %v225
    %v411 = vunpack.c.h.b16 %v225
    %v412 = vunpack.c.l.b16 %v226
    %v413 = vunpack.c.h.b16 %v226
    %v414 = vunpack.c.l.b16 %v227
    %v415 = vunpack.c.h.b16 %v227
    %v416 = vunpack.c.l.b16 %v228
    %v417 = vunpack.c.h.b16 %v228
    %v418 = vunpack.c.l.b16 %v229
    %v419 = vunpack.c.h.b16 %v229
    %v420 = vunpack.c.l.b16 %v230
    %v421 = vunpack.c.h.b16 %v230
    %v422 = vunpack.c.l.b16 %v231
    %v423 = vunpack.c.h.b16 %v231
    %v424 = vunpack.c.l.b16 %v232
    %v425 = vunpack.c.h.b16 %v232
    %v426 = vunpack.c.l.b16 %v233
    %v427 = vunpack.c.h.b16 %v233
    %v428 = vunpack.c.l.b16 %v234
    %v429 = vunpack.c.h.b16 %v234
    %v430 = vunpack.c.l.b16 %v235
    %v431 = vunpack.c.h.b16 %v235
    %v432 = vunpack.c.l.b16 %v236
    %v433 = vunpack.c.h.b16 %v236
    %v434 = vunpack.c.l.b16 %v237
    %v435 = vunpack.c.h.b16 %v237
    %v436 = vunpack.c.l.b16 %v238
    %v437 = vunpack.c.h.b16 %v238
    %v438 = vunpack.c.l.b16 %v239
    %v439 = vunpack.c.h.b16 %v239
    %v440 = vunpack.c.l.b16 %v240
    %v441 = vunpack.c.h.b16 %v240
    %v442 = vunpack.c.l.b16 %v241
    %v443 = vunpack.c.h.b16 %v241
    %v444 = vunpack.c.l.b16 %v242
    %v445 = vunpack.c.h.b16 %v242
    %v446 = vunpack.c.l.b16 %v243
    %v447 = vunpack.c.h.b16 %v243
    %v448 = vunpack.c.l.b16 %v244
    %v449 = vunpack.c.h.b16 %v244
    %v450 = vunpack.c.l.b16 %v245
    %v451 = vunpack.c.h.b16 %v245
    %v452 = vunpack.c.l.b16 %v246
    %v453 = vunpack.c.h.b16 %v246
    %v454 = vunpack.c.l.b16 %v247
    %v455 = vunpack.c.h.b16 %v247
    %v456 = vunpack.c.l.b16 %v248
    %v457 = vunpack.c.h.b16 %v248
    %v458 = vunpack.c.l.b16 %v249
    %v459 = vunpack.c.h.b16 %v249
    %v460 = vunpack.c.l.b16 %v250
    %v461 = vunpack.c.h.b16 %v250
    %v462 = vunpack.c.l.b16 %v251
    %v463 = vunpack.c.h.b16 %v251
    %v464 = vunpack.c.l.b16 %v252
    %v465 = vunpack.c.h.b16 %v252
    %v466 = vunpack.c.l.b16 %v253
    %v467 = vunpack.c.h.b16 %v253
    %v468 = vunpack.c.l.b16 %v254
    %v469 = vunpack.c.h.b16 %v254
    %v470 = vunpack.c.l.b16 %v255
    %v471 = vunpack.c.h.b16 %v255
    %v472 = vunpack.c.l.b16 %v256
    %v473 = vunpack.c.h.b16 %v256
    %v474 = vunpack.c.l.b16 %v257
    %v475 = vunpack.c.h.b16 %v257
    %v476 = vunpack.c.l.b16 %v258
    %v477 = vunpack.c.h.b16 %v258
    %v478 = vunpack.c.l.b16 %v259
    %v479 = vunpack.c.h.b16 %v259
    %v480 = vunpack.c.l.b16 %v260
    %v481 = vunpack.c.h.b16 %v260
    %v482 = vunpack.c.l.b16 %v261
    %v483 = vunpack.c.h.b16 %v261
    %v484 = vunpack.c.l.b16 %v262
    %v485 = vunpack.c.h.b16 %v262
    %v486 = vunpack.c.l.b16 %v263
    %v487 = vunpack.c.h.b16 %v263
    %v488 = vunpack.c.l.b16 %v264
    %v489 = vunpack.c.h.b16 %v264
    %v490 = vunpack.c.l.b16 %v265
    %v491 = vunpack.c.h.b16 %v265
    %v492 = vunpack.c.l.b16 %v266
    %v493 = vunpack.c.h.b16 %v266
    %v494 = vunpack.c.l.b16 %v267
    %v495 = vunpack.c.h.b16 %v267
    %v496 = vunpack.c.l.b16 %v268
    %v497 = vunpack.c.h.b16 %v268
    %v498 = vunpack.c.l.b16 %v269
    %v499 = vunpack.c.h.b16 %v269
    %v500 = vunpack.c.l.b16 %v270
    %v501 = vunpack.c.h.b16 %v270
    %v502 = vunpack.c.l.b16 %v271
    %v503 = vunpack.c.h.b16 %v271
    %v504 = vunpack.c.l.b16 %v272
    %v505 = vunpack.c.h.b16 %v272
    %v506 = vunpack.c.l.b16 %v273
    %v507 = vunpack.c.h.b16 %v273
    %v508 = vpack.c.b16 %v388, %v380
    %v509 = vpack.c.b16 %v389, %v381
    %v510 = vpack.c.b16 %v390, %v382
    %v511 = vpack.c.b16 %v391, %v383
    %v512 = vpack.c.b16 %v392, %v384
    %v513 = vpack.c.b16 %v393, %v385
    %v514 = vpack.c.b16 %v394, %v386
    %v515 = vpack.c.b16 %v395, %v387
    %v516 = vpack.c.b16 %v404, %v396
    %v517 = vpack.c.b16 %v405, %v397
    %v518 = vpack.c.b16 %v406, %v398
    %v519 = vpack.c.b16 %v407, %v399
    %v520 = vpack.c.b16 %v408, %v400
    %v521 = vpack.c.b16 %v409, %v401
    %v522 = vpack.c.b16 %v410, %v402
    %v523 = vpack.c.b16 %v411, %v403
    %v524 = vpack.c.b16 %v420, %v412
    %v525 = vpack.c.b16 %v421, %v413
    %v526 = vpack.c.b16 %v422, %v414
    %v527 = vpack.c.b16 %v423, %v415
    %v528 = vpack.c.b16 %v424, %v416
    %v529 = vpack.c.b16 %v425, %v417
    %v530 = vpack.c.b16 %v426, %v418
    %v531 = vpack.c.b16 %v427, %v419
    %v532 = vpack.c.b16 %v436, %v428
    %v533 = vpack.c.b16 %v437, %v429
    %v534 = vpack.c.b16 %v438, %v430
    %v535 = vpack.c.b16 %v439, %v431
    %v536 = vpack.c.b16 %v440, %v432
    %v537 = vpack.c.b16 %v441, %v433
    %v538 = vpack.c.b16 %v442, %v434
    %v539 = vpack.c.b16 %v443, %v435
    %v540 = vpack.c.b16 %v452, %v444
    %v541 = vpack.c.b16 %v453, %v445
    %v542 = vpack.c.b16 %v454, %v446
    %v543 = vpack.c.b16 %v455, %v447
    %v544 = vpack.c.b16 %v456, %v448
    %v545 = vpack.c.b16 %v457, %v449
    %v546 = vpack.c.b16 %v458, %v450
    %v547 = vpack.c.b16 %v459, %v451
    %v548 = vpack.c.b16 %v468, %v460
    %v549 = vpack.c.b16 %v469, %v461
    %v550 = vpack.c.b16 %v470, %v462
    %v551 = vpack.c.b16 %v471, %v463
    %v552 = vpack.c.b16 %v472, %v464
    %v553 = vpack.c.b16 %v473, %v465
    %v554 = vpack.c.b16 %v474, %v466
    %v555 = vpack.c.b16 %v475, %v467
    %v556 = vpack.c.b16 %v484, %v476
    %v557 = vpack.c.b16 %v485, %v477
    %v558 = vpack.c.b16 %v486, %v478
    %v559 = vpack.c.b16 %v487, %v479
    %v560 = vpack.c.b16 %v488, %v480
    %v561 = vpack.c.b16 %v489, %v481
    %v562 = vpack.c.b16 %v490, %v482
    %v563 = vpack.c.b16 %v491, %v483
    %v564 = vpack.c.b16 %v500, %v492
    %v565 = vpack.c.b16 %v501, %v493
    %v566 = vpack.c.b16 %v502, %v494
    %v567 = vpack.c.b16 %v503, %v495
    %v568 = vpack.c.b16 %v504, %v496
    %v569 = vpack.c.b16 %v505, %v497
    %v570 = vpack.c.b16 %v506, %v498
    %v571 = vpack.c.b16 %v507, %v499
    %636 = vmatprep.subr.bf16.mxu0 %v509
    %637 = vmatpush1.bf16.msra.mxu0 %v508
    %638 = vmatprep.subr.bf16.mxu0 %v517
    %639 = vmatpush1.bf16.msra.mxu0 %v516
    %640 = vmatprep.subr.bf16.mxu0 %v525
    %641 = vmatpush1.bf16.msra.mxu0 %v524
    %642 = vmatprep.subr.bf16.mxu0 %v533
    %643 = vmatpush1.bf16.msra.mxu0 %v532
    %644 = vmatprep.subr.bf16.mxu0 %v541
    %645 = vmatpush1.bf16.msra.mxu0 %v540
    %646 = vmatprep.subr.bf16.mxu0 %v549
    %647 = vmatpush1.bf16.msra.mxu0 %v548
    %648 = vmatprep.subr.bf16.mxu0 %v557
    %649 = vmatpush1.bf16.msra.mxu0 %v556
    %650 = vmatprep.subr.bf16.mxu0 %v565
    %651 = vmatpush1.bf16.msra.mxu0 %v564
    %652 = vmatprep.subr.bf16.mxu0 0
    %653 = vmatpush1.bf16.msra.mxu0 0
    %654 = vmatprep.subr.bf16.mxu0 0
    %655 = vmatpush1.bf16.msra.mxu0 0
    %656 = vmatprep.subr.bf16.mxu0 0
    %657 = vmatpush1.bf16.msra.mxu0 0
    %658 = vmatprep.subr.bf16.mxu0 0
    %659 = vmatpush1.bf16.msra.mxu0 0
    %660 = vmatprep.subr.bf16.mxu0 0
    %661 = vmatpush1.bf16.msra.mxu0 0
    %662 = vmatprep.subr.bf16.mxu0 0
    %663 = vmatpush1.bf16.msra.mxu0 0
    %664 = vmatprep.subr.bf16.mxu0 0
    %665 = vmatpush1.bf16.msra.mxu0 0
    %666 = vmatprep.subr.bf16.mxu0 0
    %667 = vmatpush1.bf16.msra.mxu0 0
    %668 = vmatprep.mubr.bf16.mxu0 0
    %669 = vmatmul.mubr.bf16.gmra.mrb[0].mxu0 %v209
    %v670 = vpop.f32.mrb[0].mxu0
    %v671 = vadd.f32 %v279, %v670
    %v672 = vpop.f32.mrb[0].mxu0
    %v673 = vadd.f32 %v283, %v672
    %v674 = vpop.f32.mrb[0].mxu0
    %v675 = vadd.f32 %v279, %v674
    %v676 = vpop.f32.mrb[0].mxu0
    %v677 = vadd.f32 %v283, %v676
    %678 = vdwg.mxu0
    %679 = vmatprep.subr.bf16.mxu0 %v511
    %680 = vmatpush1.bf16.msra.mxu0 %v510
    %681 = vmatprep.subr.bf16.mxu0 %v519
    %682 = vmatpush1.bf16.msra.mxu0 %v518
    %683 = vmatprep.subr.bf16.mxu0 %v527
    %684 = vmatpush1.bf16.msra.mxu0 %v526
    %685 = vmatprep.subr.bf16.mxu0 %v535
    %686 = vmatpush1.bf16.msra.mxu0 %v534
    %687 = vmatprep.subr.bf16.mxu0 %v543
    %688 = vmatpush1.bf16.msra.mxu0 %v542
    %689 = vmatprep.subr.bf16.mxu0 %v551
    %690 = vmatpush1.bf16.msra.mxu0 %v550
    %691 = vmatprep.subr.bf16.mxu0 %v559
    %692 = vmatpush1.bf16.msra.mxu0 %v558
    %693 = vmatprep.subr.bf16.mxu0 %v567
    %694 = vmatpush1.bf16.msra.mxu0 %v566
    %695 = vmatprep.subr.bf16.mxu0 0
    %696 = vmatpush1.bf16.msra.mxu0 0
    %697 = vmatprep.subr.bf16.mxu0 0
    %698 = vmatpush1.bf16.msra.mxu0 0
    %699 = vmatprep.subr.bf16.mxu0 0
    %700 = vmatpush1.bf16.msra.mxu0 0
    %701 = vmatprep.subr.bf16.mxu0 0
    %702 = vmatpush1.bf16.msra.mxu0 0
    %703 = vmatprep.subr.bf16.mxu0 0
    %704 = vmatpush1.bf16.msra.mxu0 0
    %705 = vmatprep.subr.bf16.mxu0 0
    %706 = vmatpush1.bf16.msra.mxu0 0
    %707 = vmatprep.subr.bf16.mxu0 0
    %708 = vmatpush1.bf16.msra.mxu0 0
    %709 = vmatprep.subr.bf16.mxu0 0
    %710 = vmatpush1.bf16.msra.mxu0 0
    %711 = vmatprep.mubr.bf16.mxu0 0
    %712 = vmatmul.mubr.bf16.gmra.mrb[0].mxu0 %v209
    %v713 = vpop.f32.mrb[0].mxu0
    %v714 = vadd.f32 %v287, %v713
    %v715 = vpop.f32.mrb[0].mxu0
    %v716 = vadd.f32 %v291, %v715
    %v717 = vpop.f32.mrb[0].mxu0
    %v718 = vadd.f32 %v287, %v717
    %v719 = vpop.f32.mrb[0].mxu0
    %v720 = vadd.f32 %v291, %v719
    %721 = vdwg.mxu0
    %722 = vmatprep.subr.bf16.mxu0 %v513
    %723 = vmatpush1.bf16.msra.mxu0 %v512
    %724 = vmatprep.subr.bf16.mxu0 %v521
    %725 = vmatpush1.bf16.msra.mxu0 %v520
    %726 = vmatprep.subr.bf16.mxu0 %v529
    %727 = vmatpush1.bf16.msra.mxu0 %v528
    %728 = vmatprep.subr.bf16.mxu0 %v537
    %729 = vmatpush1.bf16.msra.mxu0 %v536
    %730 = vmatprep.subr.bf16.mxu0 %v545
    %731 = vmatpush1.bf16.msra.mxu0 %v544
    %732 = vmatprep.subr.bf16.mxu0 %v553
    %733 = vmatpush1.bf16.msra.mxu0 %v552
    %734 = vmatprep.subr.bf16.mxu0 %v561
    %735 = vmatpush1.bf16.msra.mxu0 %v560
    %736 = vmatprep.subr.bf16.mxu0 %v569
    %737 = vmatpush1.bf16.msra.mxu0 %v568
    %738 = vmatprep.subr.bf16.mxu0 0
    %739 = vmatpush1.bf16.msra.mxu0 0
    %740 = vmatprep.subr.bf16.mxu0 0
    %741 = vmatpush1.bf16.msra.mxu0 0
    %742 = vmatprep.subr.bf16.mxu0 0
    %743 = vmatpush1.bf16.msra.mxu0 0
    %744 = vmatprep.subr.bf16.mxu0 0
    %745 = vmatpush1.bf16.msra.mxu0 0
    %746 = vmatprep.subr.bf16.mxu0 0
    %747 = vmatpush1.bf16.msra.mxu0 0
    %748 = vmatprep.subr.bf16.mxu0 0
    %749 = vmatpush1.bf16.msra.mxu0 0
    %750 = vmatprep.subr.bf16.mxu0 0
    %751 = vmatpush1.bf16.msra.mxu0 0
    %752 = vmatprep.subr.bf16.mxu0 0
    %753 = vmatpush1.bf16.msra.mxu0 0
    %754 = vmatprep.mubr.bf16.mxu0 0
    %755 = vmatmul.mubr.bf16.gmra.mrb[0].mxu0 %v209
    %v756 = vpop.f32.mrb[0].mxu0
    %v757 = vadd.f32 %v295, %v756
    %v758 = vpop.f32.mrb[0].mxu0
    %v759 = vadd.f32 %v299, %v758
    %v760 = vpop.f32.mrb[0].mxu0
    %v761 = vadd.f32 %v295, %v760
    %v762 = vpop.f32.mrb[0].mxu0
    %v763 = vadd.f32 %v299, %v762
    %764 = vdwg.mxu0
    %765 = vmatprep.subr.bf16.mxu0 %v515
    %766 = vmatpush1.bf16.msra.mxu0 %v514
    %767 = vmatprep.subr.bf16.mxu0 %v523
    %768 = vmatpush1.bf16.msra.mxu0 %v522
    %769 = vmatprep.subr.bf16.mxu0 %v531
    %770 = vmatpush1.bf16.msra.mxu0 %v530
    %771 = vmatprep.subr.bf16.mxu0 %v539
    %772 = vmatpush1.bf16.msra.mxu0 %v538
    %773 = vmatprep.subr.bf16.mxu0 %v547
    %774 = vmatpush1.bf16.msra.mxu0 %v546
    %775 = vmatprep.subr.bf16.mxu0 %v555
    %776 = vmatpush1.bf16.msra.mxu0 %v554
    %777 = vmatprep.subr.bf16.mxu0 %v563
    %778 = vmatpush1.bf16.msra.mxu0 %v562
    %779 = vmatprep.subr.bf16.mxu0 %v571
    %780 = vmatpush1.bf16.msra.mxu0 %v570
    %781 = vmatprep.subr.bf16.mxu0 0
    %782 = vmatpush1.bf16.msra.mxu0 0
    %783 = vmatprep.subr.bf16.mxu0 0
    %784 = vmatpush1.bf16.msra.mxu0 0
    %785 = vmatprep.subr.bf16.mxu0 0
    %786 = vmatpush1.bf16.msra.mxu0 0
    %787 = vmatprep.subr.bf16.mxu0 0
    %788 = vmatpush1.bf16.msra.mxu0 0
    %789 = vmatprep.subr.bf16.mxu0 0
    %790 = vmatpush1.bf16.msra.mxu0 0
    %791 = vmatprep.subr.bf16.mxu0 0
    %792 = vmatpush1.bf16.msra.mxu0 0
    %793 = vmatprep.subr.bf16.mxu0 0
    %794 = vmatpush1.bf16.msra.mxu0 0
    %795 = vmatprep.subr.bf16.mxu0 0
    %796 = vmatpush1.bf16.msra.mxu0 0
    %797 = vmatprep.mubr.bf16.mxu0 0
    %798 = vmatmul.mubr.bf16.gmra.mrb[0].mxu0 %v209
    %v799 = vpop.f32.mrb[0].mxu0
    %v800 = vadd.f32 %v303, %v799
    %v801 = vpop.f32.mrb[0].mxu0
    %v802 = vadd.f32 %v307, %v801
    %v803 = vpop.f32.mrb[0].mxu0
    %v804 = vadd.f32 %v303, %v803
    %v805 = vpop.f32.mrb[0].mxu0
    %v806 = vadd.f32 %v307, %v805
    %807 = vdwg.mxu0
    %vm808 = vcmp.ge.f32.partialorder %v671, 0.0
    %vm809 = vcmp.ge.f32.partialorder %v673, 0.0
    %vm810 = vcmp.ge.f32.partialorder %v714, 0.0
    %vm811 = vcmp.ge.f32.partialorder %v716, 0.0
    %vm812 = vcmp.ge.f32.partialorder %v757, 0.0
    %vm813 = vcmp.ge.f32.partialorder %v759, 0.0
    %vm814 = vcmp.ge.f32.partialorder %v800, 0.0
    %vm815 = vcmp.ge.f32.partialorder %v802, 0.0
    %vm816 = vcmp.ge.f32.partialorder %v675, 0.0
    %vm817 = vcmp.ge.f32.partialorder %v677, 0.0
    %vm818 = vcmp.ge.f32.partialorder %v718, 0.0
    %vm819 = vcmp.ge.f32.partialorder %v720, 0.0
    %vm820 = vcmp.ge.f32.partialorder %v761, 0.0
    %vm821 = vcmp.ge.f32.partialorder %v763, 0.0
    %vm822 = vcmp.ge.f32.partialorder %v804, 0.0
    %vm823 = vcmp.ge.f32.partialorder %v806, 0.0
    %v824 = vmul.f32 %v671, 0.01
    %v825 = vmul.f32 %v673, 0.01
    %v826 = vmul.f32 %v714, 0.01
    %v827 = vmul.f32 %v716, 0.01
    %v828 = vmul.f32 %v757, 0.01
    %v829 = vmul.f32 %v759, 0.01
    %v830 = vmul.f32 %v800, 0.01
    %v831 = vmul.f32 %v802, 0.01
    %v832 = vmul.f32 %v675, 0.01
    %v833 = vmul.f32 %v677, 0.01
    %v834 = vmul.f32 %v718, 0.01
    %v835 = vmul.f32 %v720, 0.01
    %v836 = vmul.f32 %v761, 0.01
    %v837 = vmul.f32 %v763, 0.01
    %v838 = vmul.f32 %v804, 0.01
    %v839 = vmul.f32 %v806, 0.01
    %v840 = vsel %vm808, %v671, %v824
    %v841 = vsel %vm809, %v673, %v825
    %v842 = vsel %vm810, %v714, %v826
    %v843 = vsel %vm811, %v716, %v827
    %v844 = vsel %vm812, %v757, %v828
    %v845 = vsel %vm813, %v759, %v829
    %v846 = vsel %vm814, %v800, %v830
    %v847 = vsel %vm815, %v802, %v831
    %v848 = vsel %vm816, %v675, %v832
    %v849 = vsel %vm817, %v677, %v833
    %v850 = vsel %vm818, %v718, %v834
    %v851 = vsel %vm819, %v720, %v835
    %v852 = vsel %vm820, %v761, %v836
    %v853 = vsel %vm821, %v763, %v837
    %v854 = vsel %vm822, %v804, %v838
    %v855 = vsel %vm823, %v806, %v839
    %v856 = vpack.c.bf16 %v848, %v840
    %v857 = vpack.c.bf16 %v849, %v841
    %v858 = vpack.c.bf16 %v850, %v842
    %v859 = vpack.c.bf16 %v851, %v843
    %v860 = vpack.c.bf16 %v852, %v844
    %v861 = vpack.c.bf16 %v853, %v845
    %v862 = vpack.c.bf16 %v854, %v846
    %v863 = vpack.c.bf16 %v855, %v847
    %v864 = vld [vmem:[#allocation8] sm:$0xf]
    %v865 = vld [vmem:[#allocation8 + $0x4] sm:$0xf]
    %v866 = vld [vmem:[#allocation8 + $0x8] sm:$0xf]
    %v867 = vld [vmem:[#allocation8 + $0xc] sm:$0xf]
    %v868 = vld [vmem:[#allocation8 + $0x10] sm:$0xf]
    %v869 = vld [vmem:[#allocation8 + $0x14] sm:$0xf]
    %v870 = vld [vmem:[#allocation8 + $0x18] sm:$0xf]
    %v871 = vld [vmem:[#allocation8 + $0x1c] sm:$0xf]
    %v872 = vld [vmem:[#allocation8 + $0x20] sm:$0xf]
    %v873 = vld [vmem:[#allocation8 + $0x24] sm:$0xf]
    %v874 = vld [vmem:[#allocation8 + $0x28] sm:$0xf]
    %v875 = vld [vmem:[#allocation8 + $0x2c] sm:$0xf]
    %v876 = vld [vmem:[#allocation8 + $0x30] sm:$0xf]
    %v877 = vld [vmem:[#allocation8 + $0x34] sm:$0xf]
    %v878 = vld [vmem:[#allocation8 + $0x38] sm:$0xf]
    %v879 = vld [vmem:[#allocation8 + $0x3c] sm:$0xf]
    %v880 = vld [vmem:[#allocation8 + $0x40] sm:$0xf]
    %v881 = vld [vmem:[#allocation8 + $0x44] sm:$0xf]
    %v882 = vld [vmem:[#allocation8 + $0x48] sm:$0xf]
    %v883 = vld [vmem:[#allocation8 + $0x4c] sm:$0xf]
    %v884 = vld [vmem:[#allocation8 + $0x50] sm:$0xf]
    %v885 = vld [vmem:[#allocation8 + $0x54] sm:$0xf]
    %v886 = vld [vmem:[#allocation8 + $0x58] sm:$0xf]
    %v887 = vld [vmem:[#allocation8 + $0x5c] sm:$0xf]
    %v888 = vld [vmem:[#allocation8 + $0x60] sm:$0xf]
    %v889 = vld [vmem:[#allocation8 + $0x64] sm:$0xf]
    %v890 = vld [vmem:[#allocation8 + $0x68] sm:$0xf]
    %v891 = vld [vmem:[#allocation8 + $0x6c] sm:$0xf]
    %v892 = vld [vmem:[#allocation8 + $0x70] sm:$0xf]
    %v893 = vld [vmem:[#allocation8 + $0x74] sm:$0xf]
    %v894 = vld [vmem:[#allocation8 + $0x78] sm:$0xf]
    %v895 = vld [vmem:[#allocation8 + $0x7c] sm:$0xf]
    %v896 = vld [vmem:[#allocation8 + $0x80] sm:$0xf]
    %v897 = vld [vmem:[#allocation8 + $0x84] sm:$0xf]
    %v898 = vld [vmem:[#allocation8 + $0x88] sm:$0xf]
    %v899 = vld [vmem:[#allocation8 + $0x8c] sm:$0xf]
    %v900 = vld [vmem:[#allocation8 + $0x90] sm:$0xf]
    %v901 = vld [vmem:[#allocation8 + $0x94] sm:$0xf]
    %v902 = vld [vmem:[#allocation8 + $0x98] sm:$0xf]
    %v903 = vld [vmem:[#allocation8 + $0x9c] sm:$0xf]
    %v904 = vld [vmem:[#allocation8 + $0xa0] sm:$0xf]
    %v905 = vld [vmem:[#allocation8 + $0xa4] sm:$0xf]
    %v906 = vld [vmem:[#allocation8 + $0xa8] sm:$0xf]
    %v907 = vld [vmem:[#allocation8 + $0xac] sm:$0xf]
    %v908 = vld [vmem:[#allocation8 + $0xb0] sm:$0xf]
    %v909 = vld [vmem:[#allocation8 + $0xb4] sm:$0xf]
    %v910 = vld [vmem:[#allocation8 + $0xb8] sm:$0xf]
    %v911 = vld [vmem:[#allocation8 + $0xbc] sm:$0xf]
    %v912 = vld [vmem:[#allocation8 + $0xc0] sm:$0xf]
    %v913 = vld [vmem:[#allocation8 + $0xc4] sm:$0xf]
    %v914 = vld [vmem:[#allocation8 + $0xc8] sm:$0xf]
    %v915 = vld [vmem:[#allocation8 + $0xcc] sm:$0xf]
    %v916 = vld [vmem:[#allocation8 + $0xd0] sm:$0xf]
    %v917 = vld [vmem:[#allocation8 + $0xd4] sm:$0xf]
    %v918 = vld [vmem:[#allocation8 + $0xd8] sm:$0xf]
    %v919 = vld [vmem:[#allocation8 + $0xdc] sm:$0xf]
    %v920 = vld [vmem:[#allocation8 + $0xe0] sm:$0xf]
    %v921 = vld [vmem:[#allocation8 + $0xe4] sm:$0xf]
    %v922 = vld [vmem:[#allocation8 + $0xe8] sm:$0xf]
    %v923 = vld [vmem:[#allocation8 + $0xec] sm:$0xf]
    %v924 = vld [vmem:[#allocation8 + $0xf0] sm:$0xf]
    %v925 = vld [vmem:[#allocation8 + $0xf4] sm:$0xf]
    %v926 = vld [vmem:[#allocation8 + $0xf8] sm:$0xf]
    %v927 = vld [vmem:[#allocation8 + $0xfc] sm:$0xf]
    %v928 = vld [vmem:[#allocation8 + $0x100] sm:$0xf]
    %v929 = vld [vmem:[#allocation8 + $0x104] sm:$0xf]
    %v930 = vld [vmem:[#allocation8 + $0x108] sm:$0xf]
    %v931 = vld [vmem:[#allocation8 + $0x10c] sm:$0xf]
    %v932 = vld [vmem:[#allocation8 + $0x110] sm:$0xf]
    %v933 = vld [vmem:[#allocation8 + $0x114] sm:$0xf]
    %v934 = vld [vmem:[#allocation8 + $0x118] sm:$0xf]
    %v935 = vld [vmem:[#allocation8 + $0x11c] sm:$0xf]
    %v936 = vld [vmem:[#allocation8 + $0x120] sm:$0xf]
    %v937 = vld [vmem:[#allocation8 + $0x124] sm:$0xf]
    %v938 = vld [vmem:[#allocation8 + $0x128] sm:$0xf]
    %v939 = vld [vmem:[#allocation8 + $0x12c] sm:$0xf]
    %v940 = vld [vmem:[#allocation8 + $0x130] sm:$0xf]
    %v941 = vld [vmem:[#allocation8 + $0x134] sm:$0xf]
    %v942 = vld [vmem:[#allocation8 + $0x138] sm:$0xf]
    %v943 = vld [vmem:[#allocation8 + $0x13c] sm:$0xf]
    %v944 = vld [vmem:[#allocation8 + $0x140] sm:$0xf]
    %v945 = vld [vmem:[#allocation8 + $0x144] sm:$0xf]
    %v946 = vld [vmem:[#allocation8 + $0x148] sm:$0xf]
    %v947 = vld [vmem:[#allocation8 + $0x14c] sm:$0xf]
    %v948 = vld [vmem:[#allocation8 + $0x150] sm:$0xf]
    %v949 = vld [vmem:[#allocation8 + $0x154] sm:$0xf]
    %v950 = vld [vmem:[#allocation8 + $0x158] sm:$0xf]
    %v951 = vld [vmem:[#allocation8 + $0x15c] sm:$0xf]
    %v952 = vld [vmem:[#allocation8 + $0x160] sm:$0xf]
    %v953 = vld [vmem:[#allocation8 + $0x164] sm:$0xf]
    %v954 = vld [vmem:[#allocation8 + $0x168] sm:$0xf]
    %v955 = vld [vmem:[#allocation8 + $0x16c] sm:$0xf]
    %v956 = vld [vmem:[#allocation8 + $0x170] sm:$0xf]
    %v957 = vld [vmem:[#allocation8 + $0x174] sm:$0xf]
    %v958 = vld [vmem:[#allocation8 + $0x178] sm:$0xf]
    %v959 = vld [vmem:[#allocation8 + $0x17c] sm:$0xf]
    %v960 = vld [vmem:[#allocation8 + $0x180] sm:$0xf]
    %v961 = vld [vmem:[#allocation8 + $0x184] sm:$0xf]
    %v962 = vld [vmem:[#allocation8 + $0x188] sm:$0xf]
    %v963 = vld [vmem:[#allocation8 + $0x18c] sm:$0xf]
    %v964 = vld [vmem:[#allocation8 + $0x190] sm:$0xf]
    %v965 = vld [vmem:[#allocation8 + $0x194] sm:$0xf]
    %v966 = vld [vmem:[#allocation8 + $0x198] sm:$0xf]
    %v967 = vld [vmem:[#allocation8 + $0x19c] sm:$0xf]
    %v968 = vld [vmem:[#allocation8 + $0x1a0] sm:$0xf]
    %v969 = vld [vmem:[#allocation8 + $0x1a4] sm:$0xf]
    %v970 = vld [vmem:[#allocation8 + $0x1a8] sm:$0xf]
    %v971 = vld [vmem:[#allocation8 + $0x1ac] sm:$0xf]
    %v972 = vld [vmem:[#allocation8 + $0x1b0] sm:$0xf]
    %v973 = vld [vmem:[#allocation8 + $0x1b4] sm:$0xf]
    %v974 = vld [vmem:[#allocation8 + $0x1b8] sm:$0xf]
    %v975 = vld [vmem:[#allocation8 + $0x1bc] sm:$0xf]
    %v976 = vld [vmem:[#allocation8 + $0x1c0] sm:$0xf]
    %v977 = vld [vmem:[#allocation8 + $0x1c4] sm:$0xf]
    %v978 = vld [vmem:[#allocation8 + $0x1c8] sm:$0xf]
    %v979 = vld [vmem:[#allocation8 + $0x1cc] sm:$0xf]
    %v980 = vld [vmem:[#allocation8 + $0x1d0] sm:$0xf]
    %v981 = vld [vmem:[#allocation8 + $0x1d4] sm:$0xf]
    %v982 = vld [vmem:[#allocation8 + $0x1d8] sm:$0xf]
    %v983 = vld [vmem:[#allocation8 + $0x1dc] sm:$0xf]
    %v984 = vld [vmem:[#allocation8 + $0x1e0] sm:$0xf]
    %v985 = vld [vmem:[#allocation8 + $0x1e4] sm:$0xf]
    %v986 = vld [vmem:[#allocation8 + $0x1e8] sm:$0xf]
    %v987 = vld [vmem:[#allocation8 + $0x1ec] sm:$0xf]
    %v988 = vld [vmem:[#allocation8 + $0x1f0] sm:$0xf]
    %v989 = vld [vmem:[#allocation8 + $0x1f4] sm:$0xf]
    %v990 = vld [vmem:[#allocation8 + $0x1f8] sm:$0xf]
    %v991 = vld [vmem:[#allocation8 + $0x1fc] sm:$0xf]
    %v992 = vld [vmem:[%s6] sm:$0x1]
    %v994 = vlaneseq
    %v995 = vshrl.u32 %v994, 7
    %v996 = vsub.s32 0, %v995
    %v997 = vrot.slane %v992, %v996
    %v1127 = vunpack.c.l.b16 %v864
    %v1128 = vunpack.c.l.b16 %v865
    %v1129 = vunpack.c.l.b16 %v866
    %v1130 = vunpack.c.l.b16 %v867
    %v1131 = vunpack.c.l.b16 %v868
    %v1132 = vunpack.c.l.b16 %v869
    %v1133 = vunpack.c.l.b16 %v870
    %v1134 = vunpack.c.l.b16 %v871
    %v1135 = vunpack.c.l.b16 %v872
    %v1136 = vunpack.c.l.b16 %v873
    %v1137 = vunpack.c.l.b16 %v874
    %v1138 = vunpack.c.l.b16 %v875
    %v1139 = vunpack.c.l.b16 %v876
    %v1140 = vunpack.c.l.b16 %v877
    %v1141 = vunpack.c.l.b16 %v878
    %v1142 = vunpack.c.l.b16 %v879
    %v1143 = vunpack.c.l.b16 %v880
    %v1144 = vunpack.c.l.b16 %v881
    %v1145 = vunpack.c.l.b16 %v882
    %v1146 = vunpack.c.l.b16 %v883
    %v1147 = vunpack.c.l.b16 %v884
    %v1148 = vunpack.c.l.b16 %v885
    %v1149 = vunpack.c.l.b16 %v886
    %v1150 = vunpack.c.l.b16 %v887
    %v1151 = vunpack.c.l.b16 %v888
    %v1152 = vunpack.c.l.b16 %v889
    %v1153 = vunpack.c.l.b16 %v890
    %v1154 = vunpack.c.l.b16 %v891
    %v1155 = vunpack.c.l.b16 %v892
    %v1156 = vunpack.c.l.b16 %v893
    %v1157 = vunpack.c.l.b16 %v894
    %v1158 = vunpack.c.l.b16 %v895
    %v1159 = vunpack.c.l.b16 %v896
    %v1160 = vunpack.c.l.b16 %v897
    %v1161 = vunpack.c.l.b16 %v898
    %v1162 = vunpack.c.l.b16 %v899
    %v1163 = vunpack.c.l.b16 %v900
    %v1164 = vunpack.c.l.b16 %v901
    %v1165 = vunpack.c.l.b16 %v902
    %v1166 = vunpack.c.l.b16 %v903
    %v1167 = vunpack.c.l.b16 %v904
    %v1168 = vunpack.c.l.b16 %v905
    %v1169 = vunpack.c.l.b16 %v906
    %v1170 = vunpack.c.l.b16 %v907
    %v1171 = vunpack.c.l.b16 %v908
    %v1172 = vunpack.c.l.b16 %v909
    %v1173 = vunpack.c.l.b16 %v910
    %v1174 = vunpack.c.l.b16 %v911
    %v1175 = vunpack.c.l.b16 %v912
    %v1176 = vunpack.c.l.b16 %v913
    %v1177 = vunpack.c.l.b16 %v914
    %v1178 = vunpack.c.l.b16 %v915
    %v1179 = vunpack.c.l.b16 %v916
    %v1180 = vunpack.c.l.b16 %v917
    %v1181 = vunpack.c.l.b16 %v918
    %v1182 = vunpack.c.l.b16 %v919
    %v1183 = vunpack.c.l.b16 %v920
    %v1184 = vunpack.c.l.b16 %v921
    %v1185 = vunpack.c.l.b16 %v922
    %v1186 = vunpack.c.l.b16 %v923
    %v1187 = vunpack.c.l.b16 %v924
    %v1188 = vunpack.c.l.b16 %v925
    %v1189 = vunpack.c.l.b16 %v926
    %v1190 = vunpack.c.l.b16 %v927
    %v1191 = vunpack.c.l.b16 %v928
    %v1192 = vunpack.c.l.b16 %v929
    %v1193 = vunpack.c.l.b16 %v930
    %v1194 = vunpack.c.l.b16 %v931
    %v1195 = vunpack.c.l.b16 %v932
    %v1196 = vunpack.c.l.b16 %v933
    %v1197 = vunpack.c.l.b16 %v934
    %v1198 = vunpack.c.l.b16 %v935
    %v1199 = vunpack.c.l.b16 %v936
    %v1200 = vunpack.c.l.b16 %v937
    %v1201 = vunpack.c.l.b16 %v938
    %v1202 = vunpack.c.l.b16 %v939
    %v1203 = vunpack.c.l.b16 %v940
    %v1204 = vunpack.c.l.b16 %v941
    %v1205 = vunpack.c.l.b16 %v942
    %v1206 = vunpack.c.l.b16 %v943
    %v1207 = vunpack.c.l.b16 %v944
    %v1208 = vunpack.c.l.b16 %v945
    %v1209 = vunpack.c.l.b16 %v946
    %v1210 = vunpack.c.l.b16 %v947
    %v1211 = vunpack.c.l.b16 %v948
    %v1212 = vunpack.c.l.b16 %v949
    %v1213 = vunpack.c.l.b16 %v950
    %v1214 = vunpack.c.l.b16 %v951
    %v1215 = vunpack.c.l.b16 %v952
    %v1216 = vunpack.c.l.b16 %v953
    %v1217 = vunpack.c.l.b16 %v954
    %v1218 = vunpack.c.l.b16 %v955
    %v1219 = vunpack.c.l.b16 %v956
    %v1220 = vunpack.c.l.b16 %v957
    %v1221 = vunpack.c.l.b16 %v958
    %v1222 = vunpack.c.l.b16 %v959
    %v1223 = vunpack.c.l.b16 %v960
    %v1224 = vunpack.c.l.b16 %v961
    %v1225 = vunpack.c.l.b16 %v962
    %v1226 = vunpack.c.l.b16 %v963
    %v1227 = vunpack.c.l.b16 %v964
    %v1228 = vunpack.c.l.b16 %v965
    %v1229 = vunpack.c.l.b16 %v966
    %v1230 = vunpack.c.l.b16 %v967
    %v1231 = vunpack.c.l.b16 %v968
    %v1232 = vunpack.c.l.b16 %v969
    %v1233 = vunpack.c.l.b16 %v970
    %v1234 = vunpack.c.l.b16 %v971
    %v1235 = vunpack.c.l.b16 %v972
    %v1236 = vunpack.c.l.b16 %v973
    %v1237 = vunpack.c.l.b16 %v974
    %v1238 = vunpack.c.l.b16 %v975
    %v1239 = vunpack.c.l.b16 %v976
    %v1240 = vunpack.c.l.b16 %v977
    %v1241 = vunpack.c.l.b16 %v978
    %v1242 = vunpack.c.l.b16 %v979
    %v1243 = vunpack.c.l.b16 %v980
    %v1244 = vunpack.c.l.b16 %v981
    %v1245 = vunpack.c.l.b16 %v982
    %v1246 = vunpack.c.l.b16 %v983
    %v1247 = vunpack.c.l.b16 %v984
    %v1248 = vunpack.c.l.b16 %v985
    %v1249 = vunpack.c.l.b16 %v986
    %v1250 = vunpack.c.l.b16 %v987
    %v1251 = vunpack.c.l.b16 %v988
    %v1252 = vunpack.c.l.b16 %v989
    %v1253 = vunpack.c.l.b16 %v990
    %v1254 = vunpack.c.l.b16 %v991
    %v1255 = vpack.c.b16 %v1128, %v1127
    %v1256 = vpack.c.b16 %v1130, %v1129
    %v1257 = vpack.c.b16 %v1132, %v1131
    %v1258 = vpack.c.b16 %v1134, %v1133
    %v1259 = vpack.c.b16 %v1136, %v1135
    %v1260 = vpack.c.b16 %v1138, %v1137
    %v1261 = vpack.c.b16 %v1140, %v1139
    %v1262 = vpack.c.b16 %v1142, %v1141
    %v1263 = vpack.c.b16 %v1144, %v1143
    %v1264 = vpack.c.b16 %v1146, %v1145
    %v1265 = vpack.c.b16 %v1148, %v1147
    %v1266 = vpack.c.b16 %v1150, %v1149
    %v1267 = vpack.c.b16 %v1152, %v1151
    %v1268 = vpack.c.b16 %v1154, %v1153
    %v1269 = vpack.c.b16 %v1156, %v1155
    %v1270 = vpack.c.b16 %v1158, %v1157
    %v1271 = vpack.c.b16 %v1160, %v1159
    %v1272 = vpack.c.b16 %v1162, %v1161
    %v1273 = vpack.c.b16 %v1164, %v1163
    %v1274 = vpack.c.b16 %v1166, %v1165
    %v1275 = vpack.c.b16 %v1168, %v1167
    %v1276 = vpack.c.b16 %v1170, %v1169
    %v1277 = vpack.c.b16 %v1172, %v1171
    %v1278 = vpack.c.b16 %v1174, %v1173
    %v1279 = vpack.c.b16 %v1176, %v1175
    %v1280 = vpack.c.b16 %v1178, %v1177
    %v1281 = vpack.c.b16 %v1180, %v1179
    %v1282 = vpack.c.b16 %v1182, %v1181
    %v1283 = vpack.c.b16 %v1184, %v1183
    %v1284 = vpack.c.b16 %v1186, %v1185
    %v1285 = vpack.c.b16 %v1188, %v1187
    %v1286 = vpack.c.b16 %v1190, %v1189
    %v1287 = vpack.c.b16 %v1192, %v1191
    %v1288 = vpack.c.b16 %v1194, %v1193
    %v1289 = vpack.c.b16 %v1196, %v1195
    %v1290 = vpack.c.b16 %v1198, %v1197
    %v1291 = vpack.c.b16 %v1200, %v1199
    %v1292 = vpack.c.b16 %v1202, %v1201
    %v1293 = vpack.c.b16 %v1204, %v1203
    %v1294 = vpack.c.b16 %v1206, %v1205
    %v1295 = vpack.c.b16 %v1208, %v1207
    %v1296 = vpack.c.b16 %v1210, %v1209
    %v1297 = vpack.c.b16 %v1212, %v1211
    %v1298 = vpack.c.b16 %v1214, %v1213
    %v1299 = vpack.c.b16 %v1216, %v1215
    %v1300 = vpack.c.b16 %v1218, %v1217
    %v1301 = vpack.c.b16 %v1220, %v1219
    %v1302 = vpack.c.b16 %v1222, %v1221
    %v1303 = vpack.c.b16 %v1224, %v1223
    %v1304 = vpack.c.b16 %v1226, %v1225
    %v1305 = vpack.c.b16 %v1228, %v1227
    %v1306 = vpack.c.b16 %v1230, %v1229
    %v1307 = vpack.c.b16 %v1232, %v1231
    %v1308 = vpack.c.b16 %v1234, %v1233
    %v1309 = vpack.c.b16 %v1236, %v1235
    %v1310 = vpack.c.b16 %v1238, %v1237
    %v1311 = vpack.c.b16 %v1240, %v1239
    %v1312 = vpack.c.b16 %v1242, %v1241
    %v1313 = vpack.c.b16 %v1244, %v1243
    %v1314 = vpack.c.b16 %v1246, %v1245
    %v1315 = vpack.c.b16 %v1248, %v1247
    %v1316 = vpack.c.b16 %v1250, %v1249
    %v1317 = vpack.c.b16 %v1252, %v1251
    %v1318 = vpack.c.b16 %v1254, %v1253
    %1383 = vmatprep.subr.bf16.mxu0 0
    %1384 = vmatpush1.bf16.msra.mxu0 %v1255
    %1385 = vmatprep.subr.bf16.mxu0 0
    %1386 = vmatpush1.bf16.msra.mxu0 %v1256
    %1387 = vmatprep.subr.bf16.mxu0 0
    %1388 = vmatpush1.bf16.msra.mxu0 %v1257
    %1389 = vmatprep.subr.bf16.mxu0 0
    %1390 = vmatpush1.bf16.msra.mxu0 %v1258
    %1391 = vmatprep.subr.bf16.mxu0 0
    %1392 = vmatpush1.bf16.msra.mxu0 %v1259
    %1393 = vmatprep.subr.bf16.mxu0 0
    %1394 = vmatpush1.bf16.msra.mxu0 %v1260
    %1395 = vmatprep.subr.bf16.mxu0 0
    %1396 = vmatpush1.bf16.msra.mxu0 %v1261
    %1397 = vmatprep.subr.bf16.mxu0 0
    %1398 = vmatpush1.bf16.msra.mxu0 %v1262
    %1399 = vmatprep.subr.bf16.mxu0 0
    %1400 = vmatpush1.bf16.msra.mxu0 %v1263
    %1401 = vmatprep.subr.bf16.mxu0 0
    %1402 = vmatpush1.bf16.msra.mxu0 %v1264
    %1403 = vmatprep.subr.bf16.mxu0 0
    %1404 = vmatpush1.bf16.msra.mxu0 %v1265
    %1405 = vmatprep.subr.bf16.mxu0 0
    %1406 = vmatpush1.bf16.msra.mxu0 %v1266
    %1407 = vmatprep.subr.bf16.mxu0 0
    %1408 = vmatpush1.bf16.msra.mxu0 %v1267
    %1409 = vmatprep.subr.bf16.mxu0 0
    %1410 = vmatpush1.bf16.msra.mxu0 %v1268
    %1411 = vmatprep.subr.bf16.mxu0 0
    %1412 = vmatpush1.bf16.msra.mxu0 %v1269
    %1413 = vmatprep.subr.bf16.mxu0 0
    %1414 = vmatpush1.bf16.msra.mxu0 %v1270
    %1415 = vmatprep.mubr.bf16.mxu0 %v857
    %1416 = vmatmul.mubr.bf16.gmra.mrb[0].mxu0 %v856
    %v1417 = vpop.f32.mrb[0].mxu0
    %v1418 = vadd.f32 %v997, %v1417
    %v1419 = vpop.f32.mrb[0].mxu0
    %v1420 = vpop.f32.mrb[0].mxu0
    %v1421 = vadd.f32 %v997, %v1420
    %v1422 = vpop.f32.mrb[0].mxu0
    %1423 = vdwg.mxu0
    %1424 = vmatprep.subr.bf16.mxu0 0
    %1425 = vmatpush1.bf16.msra.mxu0 %v1271
    %1426 = vmatprep.subr.bf16.mxu0 0
    %1427 = vmatpush1.bf16.msra.mxu0 %v1272
    %1428 = vmatprep.subr.bf16.mxu0 0
    %1429 = vmatpush1.bf16.msra.mxu0 %v1273
    %1430 = vmatprep.subr.bf16.mxu0 0
    %1431 = vmatpush1.bf16.msra.mxu0 %v1274
    %1432 = vmatprep.subr.bf16.mxu0 0
    %1433 = vmatpush1.bf16.msra.mxu0 %v1275
    %1434 = vmatprep.subr.bf16.mxu0 0
    %1435 = vmatpush1.bf16.msra.mxu0 %v1276
    %1436 = vmatprep.subr.bf16.mxu0 0
    %1437 = vmatpush1.bf16.msra.mxu0 %v1277
    %1438 = vmatprep.subr.bf16.mxu0 0
    %1439 = vmatpush1.bf16.msra.mxu0 %v1278
    %1440 = vmatprep.subr.bf16.mxu0 0
    %1441 = vmatpush1.bf16.msra.mxu0 %v1279
    %1442 = vmatprep.subr.bf16.mxu0 0
    %1443 = vmatpush1.bf16.msra.mxu0 %v1280
    %1444 = vmatprep.subr.bf16.mxu0 0
    %1445 = vmatpush1.bf16.msra.mxu0 %v1281
    %1446 = vmatprep.subr.bf16.mxu0 0
    %1447 = vmatpush1.bf16.msra.mxu0 %v1282
    %1448 = vmatprep.subr.bf16.mxu0 0
    %1449 = vmatpush1.bf16.msra.mxu0 %v1283
    %1450 = vmatprep.subr.bf16.mxu0 0
    %1451 = vmatpush1.bf16.msra.mxu0 %v1284
    %1452 = vmatprep.subr.bf16.mxu0 0
    %1453 = vmatpush1.bf16.msra.mxu0 %v1285
    %1454 = vmatprep.subr.bf16.mxu0 0
    %1455 = vmatpush1.bf16.msra.mxu0 %v1286
    %1456 = vmatprep.mubr.bf16.mxu0 %v859
    %1457 = vmatmul.mubr.bf16.gmra.mrb[0].mxu0 %v858
    %v1458 = vpop.f32.mrb[0].mxu0
    %v1459 = vadd.f32 %v1418, %v1458
    %v1460 = vpop.f32.mrb[0].mxu0
    %v1461 = vpop.f32.mrb[0].mxu0
    %v1462 = vadd.f32 %v1421, %v1461
    %v1463 = vpop.f32.mrb[0].mxu0
    %1464 = vdwg.mxu0
    %1465 = vmatprep.subr.bf16.mxu0 0
    %1466 = vmatpush1.bf16.msra.mxu0 %v1287
    %1467 = vmatprep.subr.bf16.mxu0 0
    %1468 = vmatpush1.bf16.msra.mxu0 %v1288
    %1469 = vmatprep.subr.bf16.mxu0 0
    %1470 = vmatpush1.bf16.msra.mxu0 %v1289
    %1471 = vmatprep.subr.bf16.mxu0 0
    %1472 = vmatpush1.bf16.msra.mxu0 %v1290
    %1473 = vmatprep.subr.bf16.mxu0 0
    %1474 = vmatpush1.bf16.msra.mxu0 %v1291
    %1475 = vmatprep.subr.bf16.mxu0 0
    %1476 = vmatpush1.bf16.msra.mxu0 %v1292
    %1477 = vmatprep.subr.bf16.mxu0 0
    %1478 = vmatpush1.bf16.msra.mxu0 %v1293
    %1479 = vmatprep.subr.bf16.mxu0 0
    %1480 = vmatpush1.bf16.msra.mxu0 %v1294
    %1481 = vmatprep.subr.bf16.mxu0 0
    %1482 = vmatpush1.bf16.msra.mxu0 %v1295
    %1483 = vmatprep.subr.bf16.mxu0 0
    %1484 = vmatpush1.bf16.msra.mxu0 %v1296
    %1485 = vmatprep.subr.bf16.mxu0 0
    %1486 = vmatpush1.bf16.msra.mxu0 %v1297
    %1487 = vmatprep.subr.bf16.mxu0 0
    %1488 = vmatpush1.bf16.msra.mxu0 %v1298
    %1489 = vmatprep.subr.bf16.mxu0 0
    %1490 = vmatpush1.bf16.msra.mxu0 %v1299
    %1491 = vmatprep.subr.bf16.mxu0 0
    %1492 = vmatpush1.bf16.msra.mxu0 %v1300
    %1493 = vmatprep.subr.bf16.mxu0 0
    %1494 = vmatpush1.bf16.msra.mxu0 %v1301
    %1495 = vmatprep.subr.bf16.mxu0 0
    %1496 = vmatpush1.bf16.msra.mxu0 %v1302
    %1497 = vmatprep.mubr.bf16.mxu0 %v861
    %1498 = vmatmul.mubr.bf16.gmra.mrb[0].mxu0 %v860
    %v1499 = vpop.f32.mrb[0].mxu0
    %v1500 = vadd.f32 %v1459, %v1499
    %v1501 = vpop.f32.mrb[0].mxu0
    %v1502 = vpop.f32.mrb[0].mxu0
    %v1503 = vadd.f32 %v1462, %v1502
    %v1504 = vpop.f32.mrb[0].mxu0
    %1505 = vdwg.mxu0
    %1506 = vmatprep.subr.bf16.mxu0 0
    %1507 = vmatpush1.bf16.msra.mxu0 %v1303
    %1508 = vmatprep.subr.bf16.mxu0 0
    %1509 = vmatpush1.bf16.msra.mxu0 %v1304
    %1510 = vmatprep.subr.bf16.mxu0 0
    %1511 = vmatpush1.bf16.msra.mxu0 %v1305
    %1512 = vmatprep.subr.bf16.mxu0 0
    %1513 = vmatpush1.bf16.msra.mxu0 %v1306
    %1514 = vmatprep.subr.bf16.mxu0 0
    %1515 = vmatpush1.bf16.msra.mxu0 %v1307
    %1516 = vmatprep.subr.bf16.mxu0 0
    %1517 = vmatpush1.bf16.msra.mxu0 %v1308
    %1518 = vmatprep.subr.bf16.mxu0 0
    %1519 = vmatpush1.bf16.msra.mxu0 %v1309
    %1520 = vmatprep.subr.bf16.mxu0 0
    %1521 = vmatpush1.bf16.msra.mxu0 %v1310
    %1522 = vmatprep.subr.bf16.mxu0 0
    %1523 = vmatpush1.bf16.msra.mxu0 %v1311
    %1524 = vmatprep.subr.bf16.mxu0 0
    %1525 = vmatpush1.bf16.msra.mxu0 %v1312
    %1526 = vmatprep.subr.bf16.mxu0 0
    %1527 = vmatpush1.bf16.msra.mxu0 %v1313
    %1528 = vmatprep.subr.bf16.mxu0 0
    %1529 = vmatpush1.bf16.msra.mxu0 %v1314
    %1530 = vmatprep.subr.bf16.mxu0 0
    %1531 = vmatpush1.bf16.msra.mxu0 %v1315
    %1532 = vmatprep.subr.bf16.mxu0 0
    %1533 = vmatpush1.bf16.msra.mxu0 %v1316
    %1534 = vmatprep.subr.bf16.mxu0 0
    %1535 = vmatpush1.bf16.msra.mxu0 %v1317
    %1536 = vmatprep.subr.bf16.mxu0 0
    %1537 = vmatpush1.bf16.msra.mxu0 %v1318
    %1538 = vmatprep.mubr.bf16.mxu0 %v863
    %1539 = vmatmul.mubr.bf16.gmra.mrb[0].mxu0 %v862
    %v1540 = vpop.f32.mrb[0].mxu0
    %v1541 = vadd.f32 %v1500, %v1540
    %v1542 = vpop.f32.mrb[0].mxu0
    %v1543 = vpop.f32.mrb[0].mxu0
    %v1544 = vadd.f32 %v1503, %v1543
    %v1545 = vpop.f32.mrb[0].mxu0
    %1546 = vdwg.mxu0
    %v1547 = vmax.f32 %v1541, 0.0
    %v1548 = vmax.f32 %v1544, 0.0
    %v1549 = vand.u32 2147483647, %v1541
    %v1550 = vand.u32 2147483647, %v1544
    %v1551 = vsub.f32 0.0, %v1549
    %v1552 = vsub.f32 0.0, %v1550
    %v1553 = vmul.f32 %v1551, 1.442695
    %v1554 = vpow.pop %v1553
    %v1555 = vmul.f32 %v1552, 1.442695
    %v1556 = vpow.pop %v1555
    %v1557 = vadd.f32 %v1554, 1.0
    %v1558 = vlog2.pop %v1557
    %v1559 = vmul.f32 %v1558, 0.6931472
    %v1560 = vmul.f32 -0.5, %v1554
    %v1561 = vadd.f32 %v1560, 1.0
    %v1562 = vmul.f32 %v1561, %v1554
    %v1563 = vand.u32 2147483647, %v1554
    %vm1564 = vcmp.lt.f32.partialorder %v1563, 0.0004427343
    %v1565 = vsel %vm1564, %v1562, %v1559
    %v1566 = vadd.f32 %v1556, 1.0
    %v1567 = vlog2.pop %v1566
    %v1568 = vmul.f32 %v1567, 0.6931472
    %v1569 = vmul.f32 -0.5, %v1556
    %v1570 = vadd.f32 %v1569, 1.0
    %v1571 = vmul.f32 %v1570, %v1556
    %v1572 = vand.u32 2147483647, %v1556
    %vm1573 = vcmp.lt.f32.partialorder %v1572, 0.0004427343
    %v1574 = vsel %vm1573, %v1571, %v1568
    %v1575 = vadd.f32 %v1547, %v1565
    %v1576 = vadd.f32 %v1548, %v1574
    %1577 = vst [vmem:[#allocation10] sm:$0xff] %v1575
    %1578 = vst [vmem:[#allocation10 + $0x8] sm:$0xff] %v1576
    // Predicated region
    $region46: #{tpu_custom_call.1} parent=1 // pred_check
      _
    $region47: #{tpu_custom_call.1} parent=1 // pred_check_branch
      %1580 = sbr.rel (0) target = $region49
    $region48: #{tpu_custom_call.1} parent=1 // pred_region
      %s1582 = ssub.s32 256, 256
      %1583 = vsyncadd [#allocation4], %s1582
      %s1584 = sshll.u32 [#allocation10], 4
      %s1585 = int_to_ptr.vmem [resolvable:$true] %s1584
      %1590 = dma.vmem_to_hbm [thread:$0]  %s1585, 256, %s7, [#allocation4], 128, 128, 8
    $region49: #{tpu_custom_call.1} parent=1 // pred_fallthru
      _
    // Predicated region
    $region50: #{tpu_custom_call.1} parent=1 // pred_check
      _
    $region51: #{tpu_custom_call.1} parent=1 // pred_check_branch
      %1592 = sbr.rel (0) target = $region53
    $region52: #{tpu_custom_call.1} parent=1 // pred_region
      %1593 = dma.done [#allocation4], 256
    $region53: #{tpu_custom_call.1} parent=1 // pred_fallthru
      _
    %1594 = vsyncpa [#allocation3], 1
    %1595 = vsyncpa [#allocation6], 1
    %1596 = vsyncpa [#allocation9], 1
    %1597 = vsyncpa [#allocation4], 1

</llo_original>
